<compile_context>
chip_gen: v7x
topology: tpu7x:2x2x1
jax: 0.10.0
libtpu: 0.0.40
codegen_flags: <defaults>
</compile_context>

<pallas_src>
import functools

import jax
import jax.numpy as jnp
from jax.experimental import pallas as pl
from jax.experimental.pallas import tpu as pltpu


def _round_up(x, m):
    return (x + m - 1) // m * m


def _padded_bytes(rows, cols, itemsize):
    # (8, 128) tile padding Mosaic applies to 2-D VMEM buffers (f32 granularity
    # is conservative for narrower dtypes).
    return _round_up(max(rows, 1), 8) * _round_up(max(cols, 1), 128) * itemsize


def _physical_vmem_bytes():
    """Per-core VMEM capacity; conservative fallback = v7x (smallest)."""
    try:
        info = pltpu.get_tpu_info()
        cap = getattr(info, "vmem_capacity_bytes", None)
        if cap:
            return int(cap)
    except Exception:
        pass
    return 64 * 1024 * 1024


def _value_net_kernel(xt_ref, w1_ref, b1_ref, w2_ref, b2_ref, o_ref, *, matmul_dtype):
    # fc1 on the MXU in transposed orientation: (H, S) @ (S, tb) -> (H, tb),
    # bf16 operands with f32 accumulation. Bias add / ReLU stay in f32 (VPU).
    xt = xt_ref[...].astype(matmul_dtype)
    w1 = w1_ref[...].astype(matmul_dtype)          # no-op: weights pre-converted
    h = jnp.dot(w1, xt, preferred_element_type=jnp.float32) + b1_ref[...]
    h = jnp.maximum(h, 0.0)

    # fc2 (scalar value head): VPU multiply + cross-sublane reduction keeps the
    # batch on the lane axis, so the store below is a lane-dense (1, tb) block.
    v = jnp.sum(h * w2_ref[...], axis=0, keepdims=True) + b2_ref[...]
    o_ref[...] = v.astype(o_ref.dtype)


def value_net_forward(x, fc1_w, fc1_b, fc2_w, fc2_b, *, block_b=2048,
                      matmul_dtype=jnp.bfloat16, use_pallas=None):
    """ValueNet forward: relu(x @ fc1_w.T + fc1_b) @ fc2_w.T + fc2_b.

    x:      (B, state_dim) float32
    fc1_w:  (hidden_dim, state_dim)   -- PyTorch Linear layout (may be bf16)
    fc1_b:  (hidden_dim,)
    fc2_w:  (1, hidden_dim)
    fc2_b:  (1,)
    returns (B, 1) float32
    """
    B, S = x.shape
    H, S_w = fc1_w.shape
    assert S_w == S
    assert fc1_b.shape == (H,)
    assert fc2_w.shape == (1, H)
    assert fc2_b.shape == (1,)

    # Tiny workloads: the pallas_call is pure launch/DMA overhead; XLA fuses
    # this trivially. Keep the math identical to the kernel (bf16 fc1, f32 fc2).
    if use_pallas is None:
        use_pallas = B * max(S, H) >= (1 << 18)
    if not use_pallas:
        h = jnp.maximum(
            jnp.dot(x.astype(matmul_dtype), fc1_w.T.astype(matmul_dtype),
                    preferred_element_type=jnp.float32) + fc1_b, 0.0)
        return (jnp.dot(h, fc2_w.reshape(-1, 1).astype(jnp.float32))
                + fc2_b).astype(jnp.float32)

    # ---- batch tile selection (lane-aligned, as large as VMEM allows) -------
    tb = min(_round_up(B, 128), max(128, _round_up(block_b, 128)))

    phys_vmem = _physical_vmem_bytes()
    vmem_cap = int(phys_vmem * 0.75)            # headroom for compiler scratch

    def vmem_estimate(tb_):
        return (
            2 * _padded_bytes(S, tb_, 4)                      # x.T tiles (dbl-buf)
            + 2 * _padded_bytes(1, tb_, 4)                    # out tiles (dbl-buf)
            + _padded_bytes(H, S, fc1_w.dtype.itemsize)       # fc1 weight (resident)
            + 2 * _padded_bytes(H, 1, 4)                      # fc1 bias / fc2 weight
            + _padded_bytes(1, 1, 4)                          # fc2 bias
            + 2 * _padded_bytes(H, tb_, 4)                    # h f32 + recast headroom
        )

    while vmem_estimate(tb) > vmem_cap and tb > 128:
        tb = max(128, (tb // 2) // 128 * 128)

    Bp = _round_up(B, tb)
    grid = (Bp // tb,)

    vmem_limit = int(min(vmem_cap,
                         max(16 * 1024 * 1024,
                             int(vmem_estimate(tb) * 1.5) + (1 << 20))))

    # ---- operand layout ------------------------------------------------------
    # Batch on the lane (last) axis; fc1 weight stays in PyTorch (H, S) layout.
    xt = x.T                                     # (S, B)
    if Bp != B:
        xt = jnp.pad(xt, ((0, 0), (0, Bp - B)))
    b1_col = fc1_b.reshape(H, 1).astype(jnp.float32)
    w2_col = fc2_w.reshape(H, 1).astype(jnp.float32)     # fc2_w.T as a column
    b2_mat = fc2_b.reshape(1, 1).astype(jnp.float32)

    cost = pl.CostEstimate(
        flops=2 * Bp * S * H + 2 * Bp * H,
        transcendentals=0,
        bytes_accessed=(Bp * S * x.dtype.itemsize
                        + H * S * fc1_w.dtype.itemsize
                        + (2 * H + 1) * 4
                        + Bp * 4),
    )

    out = pl.pallas_call(
        functools.partial(_value_net_kernel, matmul_dtype=matmul_dtype),
        out_shape=jax.ShapeDtypeStruct((1, Bp), jnp.float32),
        grid=grid,
        in_specs=[
            pl.BlockSpec((S, tb), lambda i: (0, i)),   # x.T: tiled on batch (lanes)
            pl.BlockSpec((H, S), lambda i: (0, 0)),    # fc1 weight (resident)
            pl.BlockSpec((H, 1), lambda i: (0, 0)),    # fc1 bias column (resident)
            pl.BlockSpec((H, 1), lambda i: (0, 0)),    # fc2 weight column (resident)
            pl.BlockSpec((1, 1), lambda i: (0, 0)),    # fc2 bias (resident)
        ],
        out_specs=pl.BlockSpec((1, tb), lambda i: (0, i)),   # lane-dense output
        compiler_params=pltpu.CompilerParams(
            dimension_semantics=("parallel",),          # batch tiles independent
            vmem_limit_bytes=vmem_limit,
        ),
        cost_estimate=cost,
    )(xt, fc1_w, b1_col, w2_col, b2_mat)

    return out[0, :B].reshape(B, 1)


def value_net_reference(x, fc1_w, fc1_b, fc2_w, fc2_b, matmul_dtype=jnp.bfloat16):
    """Pure-JAX reference doing the exact same math as the kernel."""
    h = jnp.dot(x.astype(matmul_dtype), fc1_w.T.astype(matmul_dtype),
                preferred_element_type=jnp.float32) + fc1_b.astype(jnp.float32)
    h = jnp.maximum(h, 0.0)
    return (jnp.dot(h, fc2_w.reshape(-1, 1).astype(jnp.float32))
            + fc2_b.astype(jnp.float32))


def init_params(key, state_dim, hidden_dim, matmul_dtype=jnp.bfloat16):
    """PyTorch-Linear-style init (uniform +/- 1/sqrt(fan_in)), PyTorch layouts.

    The fc1 weight is converted to the MXU dtype ONCE here (model setup), so the
    kernel's per-step weight DMA and casts are halved vs. f32-resident weights.
    """
    k1, k2, k3, k4 = jax.random.split(key, 4)
    lim1 = 1.0 / jnp.sqrt(state_dim)
    lim2 = 1.0 / jnp.sqrt(hidden_dim)
    fc1_w = jax.random.uniform(k1, (hidden_dim, state_dim), jnp.float32, -lim1, lim1)
    fc1_b = jax.random.uniform(k2, (hidden_dim,), jnp.float32, -lim1, lim1)
    fc2_w = jax.random.uniform(k3, (1, hidden_dim), jnp.float32, -lim2, lim2)
    fc2_b = jax.random.uniform(k4, (1,), jnp.float32, -lim2, lim2)
    return fc1_w.astype(matmul_dtype), fc1_b, fc2_w, fc2_b


if __name__ == "__main__":
    # CartPole-ish TRPO dims; batch large enough to exercise padding + tiling.
    batch, state_dim, hidden_dim = 1000, 4, 128

    key = jax.random.PRNGKey(0)
    kx, kp = jax.random.split(key)
    x = jax.random.normal(kx, (batch, state_dim), dtype=jnp.float32)
    fc1_w, fc1_b, fc2_w, fc2_b = init_params(kp, state_dim, hidden_dim)

    # Force the Pallas path (the auto heuristic routes tiny RL batches to XLA).
    values = value_net_forward(x, fc1_w, fc1_b, fc2_w, fc2_b, use_pallas=True)
    values = jax.block_until_ready(values)

    assert values.shape == (batch, 1)
    assert bool(jnp.all(jnp.isfinite(values)))

    # Tight check against a reference with identical bf16-operand math.
    ref_bf16 = value_net_reference(x, fc1_w, fc1_b, fc2_w, fc2_b)
    assert jnp.allclose(values, ref_bf16, atol=1e-3, rtol=1e-3)

    # Loose sanity check against the full-f32 PyTorch-equivalent forward.
    ref_f32 = (jnp.maximum(x @ fc1_w.T.astype(jnp.float32) + fc1_b, 0.0)
               @ fc2_w.reshape(-1, 1).astype(jnp.float32)) + fc2_b
    assert jnp.allclose(values, ref_f32, atol=3e-2, rtol=3e-2)

    # Tiny-batch auto path (fused XLA fallback) stays numerically consistent.
    small = value_net_forward(x[:8], fc1_w, fc1_b, fc2_w, fc2_b)
    small = jax.block_until_ready(small)
    assert small.shape == (8, 1)
    assert jnp.allclose(small, ref_bf16[:8], atol=1e-3, rtol=1e-3)

    print("KERNEL_OK")
</pallas_src>

<mosaic_0001>
module attributes {stable_mosaic.version = 11 : i64} {
  func.func @_value_net_kernel(%arg0: i32, %arg1: memref<4x1024xf32, #tpu.memory_space<vmem>>, %arg2: memref<128x4xbf16, #tpu.memory_space<vmem>>, %arg3: memref<128x1xf32, #tpu.memory_space<vmem>>, %arg4: memref<128x1xf32, #tpu.memory_space<vmem>>, %arg5: memref<1x1xf32, #tpu.memory_space<vmem>>, %arg6: memref<1x1024xf32, #tpu.memory_space<vmem>>) attributes {dimension_semantics = [#tpu.dimension_semantics<parallel>], iteration_bounds = array<i64: 1>, scalar_prefetch = 0 : i64, scratch_operands = 0 : i64, tpu.core_type = #tpu.core_type<tc>, window_params = [{transform_indices = @transform_0, window_bounds = array<i64: 4, 1024>}, {pipeline_mode = #tpu.pipeline_mode<synchronous>, transform_indices = @transform_1, window_bounds = array<i64: 128, 4>}, {pipeline_mode = #tpu.pipeline_mode<synchronous>, transform_indices = @transform_2, window_bounds = array<i64: 128, 1>}, {pipeline_mode = #tpu.pipeline_mode<synchronous>, transform_indices = @transform_3, window_bounds = array<i64: 128, 1>}, {pipeline_mode = #tpu.pipeline_mode<synchronous>, transform_indices = @transform_4, window_bounds = array<i64: 1, 1>}, {transform_indices = @transform_5, window_bounds = array<i64: 1, 1024>}]} {
    %c0 = arith.constant 0 : index
    %c0_0 = arith.constant 0 : index
    %0 = vector.load %arg1[%c0, %c0_0] : memref<4x1024xf32, #tpu.memory_space<vmem>>, vector<4x1024xf32>
    %1 = arith.truncf %0 : vector<4x1024xf32> to vector<4x1024xbf16>
    %c0_1 = arith.constant 0 : index
    %c0_2 = arith.constant 0 : index
    %2 = vector.load %arg2[%c0_1, %c0_2] : memref<128x4xbf16, #tpu.memory_space<vmem>>, vector<128x4xbf16>
    %cst = arith.constant dense<0.000000e+00> : vector<128x1024xf32>
    %3 = tpu.matmul %2, %1, %cst {dimension_numbers = #tpu.dot_dimension_numbers<[1], [0], [0], [1], [0, 0, 1, 1], [], []>} : vector<128x4xbf16>, vector<4x1024xbf16>, vector<128x1024xf32> -> vector<128x1024xf32>
    %c0_3 = arith.constant 0 : index
    %c0_4 = arith.constant 0 : index
    %4 = vector.load %arg3[%c0_3, %c0_4] : memref<128x1xf32, #tpu.memory_space<vmem>>, vector<128x1xf32>
    %5 = vector.broadcast %4 : vector<128x1xf32> to vector<128x1024xf32>
    %6 = arith.addf %3, %5 : vector<128x1024xf32>
    %cst_5 = arith.constant 0.000000e+00 : f32
    %7 = vector.broadcast %cst_5 : f32 to vector<128x1024xf32>
    %8 = arith.maximumf %6, %7 : vector<128x1024xf32>
    %c0_6 = arith.constant 0 : index
    %c0_7 = arith.constant 0 : index
    %9 = vector.load %arg4[%c0_6, %c0_7] : memref<128x1xf32, #tpu.memory_space<vmem>>, vector<128x1xf32>
    %10 = vector.broadcast %9 : vector<128x1xf32> to vector<128x1024xf32>
    %11 = arith.mulf %8, %10 : vector<128x1024xf32>
    %cst_8 = arith.constant dense<0.000000e+00> : vector<1024xf32>
    %12 = vector.multi_reduction <add>, %11, %cst_8 [0] : vector<128x1024xf32> to vector<1024xf32>
    %13 = vector.shape_cast %12 : vector<1024xf32> to vector<1x1024xf32>
    %c0_9 = arith.constant 0 : index
    %c0_10 = arith.constant 0 : index
    %14 = vector.load %arg5[%c0_9, %c0_10] : memref<1x1xf32, #tpu.memory_space<vmem>>, vector<1x1xf32>
    %15 = vector.broadcast %14 : vector<1x1xf32> to vector<1x1024xf32>
    %16 = arith.addf %13, %15 : vector<1x1024xf32>
    %c0_11 = arith.constant 0 : index
    %c0_12 = arith.constant 0 : index
    %17 = vector.load %arg6[%c0_11, %c0_12] : memref<1x1024xf32, #tpu.memory_space<vmem>>, vector<1x1024xf32>
    tpu.vector_store %arg6[%c0_11, %c0_12], %16 {strides = array<i32>} : memref<1x1024xf32, #tpu.memory_space<vmem>>, vector<1x1024xf32>,
    return
  }
  func.func @transform_0(%arg0: i32) -> (i32, i32) {
    %c0_i32 = arith.constant 0 : i32
    %c0_i32_0 = arith.constant 0 : i32
    return %c0_i32, %arg0 : i32, i32
  }
  func.func @transform_1(%arg0: i32) -> (i32, i32) {
    %c0_i32 = arith.constant 0 : i32
    %c0_i32_0 = arith.constant 0 : i32
    %c0_i32_1 = arith.constant 0 : i32
    return %c0_i32, %c0_i32_0 : i32, i32
  }
  func.func @transform_2(%arg0: i32) -> (i32, i32) {
    %c0_i32 = arith.constant 0 : i32
    %c0_i32_0 = arith.constant 0 : i32
    %c0_i32_1 = arith.constant 0 : i32
    return %c0_i32, %c0_i32_0 : i32, i32
  }
  func.func @transform_3(%arg0: i32) -> (i32, i32) {
    %c0_i32 = arith.constant 0 : i32
    %c0_i32_0 = arith.constant 0 : i32
    %c0_i32_1 = arith.constant 0 : i32
    return %c0_i32, %c0_i32_0 : i32, i32
  }
  func.func @transform_4(%arg0: i32) -> (i32, i32) {
    %c0_i32 = arith.constant 0 : i32
    %c0_i32_0 = arith.constant 0 : i32
    %c0_i32_1 = arith.constant 0 : i32
    return %c0_i32, %c0_i32_0 : i32, i32
  }
  func.func @transform_5(%arg0: i32) -> (i32, i32) {
    %c0_i32 = arith.constant 0 : i32
    %c0_i32_0 = arith.constant 0 : i32
    return %c0_i32, %arg0 : i32, i32
  }
}

</mosaic_0001>

<llo_original>
// kernel: tpu_custom_call.1
$region0: #{tpu_custom_call.1}
  #allocation0 [shape = 'u32[]', space=smem, size = 0x4, offset = 0x4, fixed_abs, tag = 'smem constant byte address 0x4 - core index']
  #allocation1 [shape = 'u32[144,128]{1,0:T(1,128)}', space=vmem, size = 0x12000, scoped, tag = 'internal scratch']
  #allocation2 [shape = 'f32[1,1]{1,0:T(1,128)S(1)}', space=vmem, size = 0x200, scoped, tag = 'scoped memory for tpu_custom_call.1']
  %s0 = inlined_call_operand.vmem [shape: f32[4,1024], index: 0, kind: input, shape index: {}]
  %s1 = inlined_call_operand.vmem [shape: bf16[128,4], index: 1, kind: input, shape index: {}]
  %s2 = inlined_call_operand.vmem [shape: f32[128,1], index: 2, kind: input, shape index: {}]
  %s3 = inlined_call_operand.vmem [shape: f32[128,1], index: 3, kind: input, shape index: {}]
  %s4 = inlined_call_operand.<no memory space> [shape: f32[1,1], index: 4, kind: input, shape index: {}]
  %s5 = inlined_call_operand.hbm [shape: f32[1,1024], index: 5, kind: output, shape index: {}]
  %s6 = sld [smem:[#allocation0]]
  $region30: #{tpu_custom_call.1} parent=0
    _
  %s8 = ssub.s32 1, %s6
  %s9 = scalar_select 0, %s8, %s6
  %v10 = vstv %s4
  %11 = vst [vmem:[#allocation2] sm:$0x1] %v10
  $region1: #{tpu_custom_call.1} parent=0
    #allocation3 [shape = 'u8[4096]{0}', space=vmem, size = 0x1000, scoped, tag = 'output window, operand 0, single buffered']
    #allocation4 [shape = 's32[1]{0}', space=sflag, size = 0x4, scoped, tag = 'scoped memory for tpu_custom_call.1']
    %12 = vsyncpa [#allocation4], 0
    // Predicated region
    $region2: #{tpu_custom_call.1} parent=1 // pred_check
      _
    $region3: #{tpu_custom_call.1} parent=1 // pred_check_branch
      %14 = sbr.rel (0) target = $region5
    $region4: #{tpu_custom_call.1} parent=1 // pred_region
      _
    $region5: #{tpu_custom_call.1} parent=1 // pred_fallthru
      _
    // Predicated region
    $region6: #{tpu_custom_call.1} parent=1 // pred_check
      _
    $region7: #{tpu_custom_call.1} parent=1 // pred_check_branch
      %16 = sbr.rel (0) target = $region9
    $region8: #{tpu_custom_call.1} parent=1 // pred_region
      _
    $region9: #{tpu_custom_call.1} parent=1 // pred_fallthru
      _
    // Predicated region
    $region10: #{tpu_custom_call.1} parent=1 // pred_check
      _
    $region11: #{tpu_custom_call.1} parent=1 // pred_check_branch
      %18 = sbr.rel (0) target = $region13
    $region12: #{tpu_custom_call.1} parent=1 // pred_region
      _
    $region13: #{tpu_custom_call.1} parent=1 // pred_fallthru
      _
    // Predicated region
    $region14: #{tpu_custom_call.1} parent=1 // pred_check
      _
    $region15: #{tpu_custom_call.1} parent=1 // pred_check_branch
      %20 = sbr.rel (0) target = $region17
    $region16: #{tpu_custom_call.1} parent=1 // pred_region
      _
    $region17: #{tpu_custom_call.1} parent=1 // pred_fallthru
      _
    // Predicated region
    $region18: #{tpu_custom_call.1} parent=1 // pred_check
      _
    $region19: #{tpu_custom_call.1} parent=1 // pred_check_branch
      %22 = sbr.rel (0) target = $region21
    $region20: #{tpu_custom_call.1} parent=1 // pred_region
      _
    $region21: #{tpu_custom_call.1} parent=1 // pred_fallthru
      _
    %v24 = vld [vmem:[%s0] sm:$0xff]
    %v25 = vld [vmem:[%s0 + $0x8] sm:$0xff]
    %v26 = vld [vmem:[%s0 + $0x10] sm:$0xff]
    %v27 = vld [vmem:[%s0 + $0x18] sm:$0xff]
    %v32 = vcombine.high %v24, %v24
    %v33 = vcombine.high %v25, %v25
    %v34 = vcombine.high %v26, %v26
    %v35 = vcombine.high %v27, %v27
    %v40 = vpack.c.bf16 %v24, %v24
    %v41 = vpack.c.bf16 %v32, %v32
    %v42 = vpack.c.bf16 %v25, %v25
    %v43 = vpack.c.bf16 %v33, %v33
    %v44 = vpack.c.bf16 %v26, %v26
    %v45 = vpack.c.bf16 %v34, %v34
    %v46 = vpack.c.bf16 %v27, %v27
    %v47 = vpack.c.bf16 %v35, %v35
    %v48 = vld [vmem:[%s1] sm:$0xf]
    %v49 = vld [vmem:[%s1 + $0x4] sm:$0xf]
    %v50 = vld [vmem:[%s1 + $0x8] sm:$0xf]
    %v51 = vld [vmem:[%s1 + $0xc] sm:$0xf]
    %v52 = vld [vmem:[%s1 + $0x10] sm:$0xf]
    %v53 = vld [vmem:[%s1 + $0x14] sm:$0xf]
    %v54 = vld [vmem:[%s1 + $0x18] sm:$0xf]
    %v55 = vld [vmem:[%s1 + $0x1c] sm:$0xf]
    %v56 = vld [vmem:[%s1 + $0x20] sm:$0xf]
    %v57 = vld [vmem:[%s1 + $0x24] sm:$0xf]
    %v58 = vld [vmem:[%s1 + $0x28] sm:$0xf]
    %v59 = vld [vmem:[%s1 + $0x2c] sm:$0xf]
    %v60 = vld [vmem:[%s1 + $0x30] sm:$0xf]
    %v61 = vld [vmem:[%s1 + $0x34] sm:$0xf]
    %v62 = vld [vmem:[%s1 + $0x38] sm:$0xf]
    %v63 = vld [vmem:[%s1 + $0x3c] sm:$0xf]
    %v64 = vld [vmem:[%s2] sm:$0xff]
    %v65 = vld [vmem:[%s2 + $0x8] sm:$0xff]
    %v66 = vld [vmem:[%s2 + $0x10] sm:$0xff]
    %v67 = vld [vmem:[%s2 + $0x18] sm:$0xff]
    %v68 = vld [vmem:[%s2 + $0x20] sm:$0xff]
    %v69 = vld [vmem:[%s2 + $0x28] sm:$0xff]
    %v70 = vld [vmem:[%s2 + $0x30] sm:$0xff]
    %v71 = vld [vmem:[%s2 + $0x38] sm:$0xff]
    %v72 = vld [vmem:[%s2 + $0x40] sm:$0xff]
    %v73 = vld [vmem:[%s2 + $0x48] sm:$0xff]
    %v74 = vld [vmem:[%s2 + $0x50] sm:$0xff]
    %v75 = vld [vmem:[%s2 + $0x58] sm:$0xff]
    %v76 = vld [vmem:[%s2 + $0x60] sm:$0xff]
    %v77 = vld [vmem:[%s2 + $0x68] sm:$0xff]
    %v78 = vld [vmem:[%s2 + $0x70] sm:$0xff]
    %v79 = vld [vmem:[%s2 + $0x78] sm:$0xff]
    %81 = vset.pattern.permute.xlu0 0
    %82 = vperm.xlu0 %81, %v64
    %v83 = vpop.permute.xlu0 %82
    %86 = vset.pattern.permute.xlu0 0
    %87 = vperm.xlu0 %86, %v65
    %v88 = vpop.permute.xlu0 %87
    %91 = vset.pattern.permute.xlu0 0
    %92 = vperm.xlu0 %91, %v66
    %v93 = vpop.permute.xlu0 %92
    %96 = vset.pattern.permute.xlu0 0
    %97 = vperm.xlu0 %96, %v67
    %v98 = vpop.permute.xlu0 %97
    %101 = vset.pattern.permute.xlu0 0
    %102 = vperm.xlu0 %101, %v68
    %v103 = vpop.permute.xlu0 %102
    %106 = vset.pattern.permute.xlu0 0
    %107 = vperm.xlu0 %106, %v69
    %v108 = vpop.permute.xlu0 %107
    %111 = vset.pattern.permute.xlu0 0
    %112 = vperm.xlu0 %111, %v70
    %v113 = vpop.permute.xlu0 %112
    %116 = vset.pattern.permute.xlu0 0
    %117 = vperm.xlu0 %116, %v71
    %v118 = vpop.permute.xlu0 %117
    %121 = vset.pattern.permute.xlu0 0
    %122 = vperm.xlu0 %121, %v72
    %v123 = vpop.permute.xlu0 %122
    %126 = vset.pattern.permute.xlu0 0
    %127 = vperm.xlu0 %126, %v73
    %v128 = vpop.permute.xlu0 %127
    %131 = vset.pattern.permute.xlu0 0
    %132 = vperm.xlu0 %131, %v74
    %v133 = vpop.permute.xlu0 %132
    %136 = vset.pattern.permute.xlu0 0
    %137 = vperm.xlu0 %136, %v75
    %v138 = vpop.permute.xlu0 %137
    %141 = vset.pattern.permute.xlu0 0
    %142 = vperm.xlu0 %141, %v76
    %v143 = vpop.permute.xlu0 %142
    %146 = vset.pattern.permute.xlu0 0
    %147 = vperm.xlu0 %146, %v77
    %v148 = vpop.permute.xlu0 %147
    %151 = vset.pattern.permute.xlu0 0
    %152 = vperm.xlu0 %151, %v78
    %v153 = vpop.permute.xlu0 %152
    %156 = vset.pattern.permute.xlu0 0
    %157 = vperm.xlu0 %156, %v79
    %v158 = vpop.permute.xlu0 %157
    %v176 = vunpack.c.l.b16 %v48
    %v177 = vunpack.c.l.b16 %v49
    %v178 = vunpack.c.l.b16 %v50
    %v179 = vunpack.c.l.b16 %v51
    %v180 = vunpack.c.l.b16 %v52
    %v181 = vunpack.c.l.b16 %v53
    %v182 = vunpack.c.l.b16 %v54
    %v183 = vunpack.c.l.b16 %v55
    %v184 = vunpack.c.l.b16 %v56
    %v185 = vunpack.c.l.b16 %v57
    %v186 = vunpack.c.l.b16 %v58
    %v187 = vunpack.c.l.b16 %v59
    %v188 = vunpack.c.l.b16 %v60
    %v189 = vunpack.c.l.b16 %v61
    %v190 = vunpack.c.l.b16 %v62
    %v191 = vunpack.c.l.b16 %v63
    %v192 = vpack.c.b16 %v177, %v176
    %v193 = vpack.c.b16 %v179, %v178
    %v194 = vpack.c.b16 %v181, %v180
    %v195 = vpack.c.b16 %v183, %v182
    %v196 = vpack.c.b16 %v185, %v184
    %v197 = vpack.c.b16 %v187, %v186
    %v198 = vpack.c.b16 %v189, %v188
    %v199 = vpack.c.b16 %v191, %v190
    %vm200 = vcmask 31744
    %v202 = vsel %vm200, %v192, 0
    %v205 = vsel %vm200, %v193, 0
    %v208 = vsel %vm200, %v194, 0
    %v211 = vsel %vm200, %v195, 0
    %v214 = vsel %vm200, %v196, 0
    %v217 = vsel %vm200, %v197, 0
    %v220 = vsel %vm200, %v198, 0
    %v223 = vsel %vm200, %v199, 0
    %vm225 = vcmask 1041408
    %v227 = vsel %vm225, %v40, 0
    %v230 = vsel %vm225, %v41, 0
    %v233 = vsel %vm225, %v42, 0
    %v236 = vsel %vm225, %v43, 0
    %v239 = vsel %vm225, %v44, 0
    %v242 = vsel %vm225, %v45, 0
    %v245 = vsel %vm225, %v46, 0
    %v248 = vsel %vm225, %v47, 0
    %250 = vmatprep.subr.bf16.mxu0 %v230
    %251 = vmatpush1.bf16.msra.mxu0 %v227
    %252 = vmatprep.subr.bf16.mxu0 0
    %253 = vmatpush1.bf16.msra.mxu0 0
    %254 = vmatprep.subr.bf16.mxu0 0
    %255 = vmatpush1.bf16.msra.mxu0 0
    %256 = vmatprep.subr.bf16.mxu0 0
    %257 = vmatpush1.bf16.msra.mxu0 0
    %258 = vmatprep.subr.bf16.mxu0 0
    %259 = vmatpush1.bf16.msra.mxu0 0
    %260 = vmatprep.subr.bf16.mxu0 0
    %261 = vmatpush1.bf16.msra.mxu0 0
    %262 = vmatprep.subr.bf16.mxu0 0
    %263 = vmatpush1.bf16.msra.mxu0 0
    %264 = vmatprep.subr.bf16.mxu0 0
    %265 = vmatpush1.bf16.msra.mxu0 0
    %266 = vmatprep.subr.bf16.mxu0 0
    %267 = vmatpush1.bf16.msra.mxu0 0
    %268 = vmatprep.subr.bf16.mxu0 0
    %269 = vmatpush1.bf16.msra.mxu0 0
    %270 = vmatprep.subr.bf16.mxu0 0
    %271 = vmatpush1.bf16.msra.mxu0 0
    %272 = vmatprep.subr.bf16.mxu0 0
    %273 = vmatpush1.bf16.msra.mxu0 0
    %274 = vmatprep.subr.bf16.mxu0 0
    %275 = vmatpush1.bf16.msra.mxu0 0
    %276 = vmatprep.subr.bf16.mxu0 0
    %277 = vmatpush1.bf16.msra.mxu0 0
    %278 = vmatprep.subr.bf16.mxu0 0
    %279 = vmatpush1.bf16.msra.mxu0 0
    %280 = vmatprep.subr.bf16.mxu0 0
    %281 = vmatpush1.bf16.msra.mxu0 0
    %282 = vmatprep.mubr.bf16.mxu0 0
    %283 = vmatmul.mubr.bf16.gmra.mrb[0].mxu0 %v202
    %v284 = vpop.f32.mrb[0].mxu0
    %v285 = vadd.f32 %v83, %v284
    %v286 = vpop.f32.mrb[0].mxu0
    %v287 = vadd.f32 %v83, %v286
    %v288 = vpop.f32.mrb[0].mxu0
    %v289 = vadd.f32 %v88, %v288
    %v290 = vpop.f32.mrb[0].mxu0
    %v291 = vadd.f32 %v88, %v290
    %292 = vmatprep.mubr.bf16.mxu0 0
    %293 = vmatmul.mubr.bf16.gmra.mrb[0].mxu0 %v205
    %v294 = vpop.f32.mrb[0].mxu0
    %v295 = vadd.f32 %v93, %v294
    %v296 = vpop.f32.mrb[0].mxu0
    %v297 = vadd.f32 %v93, %v296
    %v298 = vpop.f32.mrb[0].mxu0
    %v299 = vadd.f32 %v98, %v298
    %v300 = vpop.f32.mrb[0].mxu0
    %v301 = vadd.f32 %v98, %v300
    %302 = vmatprep.mubr.bf16.mxu0 0
    %303 = vmatmul.mubr.bf16.gmra.mrb[0].mxu0 %v208
    %v304 = vpop.f32.mrb[0].mxu0
    %v305 = vadd.f32 %v103, %v304
    %v306 = vpop.f32.mrb[0].mxu0
    %v307 = vadd.f32 %v103, %v306
    %v308 = vpop.f32.mrb[0].mxu0
    %v309 = vadd.f32 %v108, %v308
    %v310 = vpop.f32.mrb[0].mxu0
    %v311 = vadd.f32 %v108, %v310
    %312 = vmatprep.mubr.bf16.mxu0 0
    %313 = vmatmul.mubr.bf16.gmra.mrb[0].mxu0 %v211
    %v314 = vpop.f32.mrb[0].mxu0
    %v315 = vadd.f32 %v113, %v314
    %v316 = vpop.f32.mrb[0].mxu0
    %v317 = vadd.f32 %v113, %v316
    %v318 = vpop.f32.mrb[0].mxu0
    %v319 = vadd.f32 %v118, %v318
    %v320 = vpop.f32.mrb[0].mxu0
    %v321 = vadd.f32 %v118, %v320
    %322 = vmatprep.mubr.bf16.mxu0 0
    %323 = vmatmul.mubr.bf16.gmra.mrb[0].mxu0 %v214
    %v324 = vpop.f32.mrb[0].mxu0
    %v325 = vadd.f32 %v123, %v324
    %v326 = vpop.f32.mrb[0].mxu0
    %v327 = vadd.f32 %v123, %v326
    %v328 = vpop.f32.mrb[0].mxu0
    %v329 = vadd.f32 %v128, %v328
    %v330 = vpop.f32.mrb[0].mxu0
    %v331 = vadd.f32 %v128, %v330
    %332 = vmatprep.mubr.bf16.mxu0 0
    %333 = vmatmul.mubr.bf16.gmra.mrb[0].mxu0 %v217
    %v334 = vpop.f32.mrb[0].mxu0
    %v335 = vadd.f32 %v133, %v334
    %v336 = vpop.f32.mrb[0].mxu0
    %v337 = vadd.f32 %v133, %v336
    %v338 = vpop.f32.mrb[0].mxu0
    %v339 = vadd.f32 %v138, %v338
    %v340 = vpop.f32.mrb[0].mxu0
    %v341 = vadd.f32 %v138, %v340
    %342 = vmatprep.mubr.bf16.mxu0 0
    %343 = vmatmul.mubr.bf16.gmra.mrb[0].mxu0 %v220
    %v344 = vpop.f32.mrb[0].mxu0
    %v345 = vadd.f32 %v143, %v344
    %v346 = vpop.f32.mrb[0].mxu0
    %v347 = vadd.f32 %v143, %v346
    %v348 = vpop.f32.mrb[0].mxu0
    %v349 = vadd.f32 %v148, %v348
    %v350 = vpop.f32.mrb[0].mxu0
    %v351 = vadd.f32 %v148, %v350
    %352 = vmatprep.mubr.bf16.mxu0 0
    %353 = vmatmul.mubr.bf16.gmra.mrb[0].mxu0 %v223
    %v354 = vpop.f32.mrb[0].mxu0
    %v355 = vadd.f32 %v153, %v354
    %v356 = vpop.f32.mrb[0].mxu0
    %v357 = vadd.f32 %v153, %v356
    %v358 = vpop.f32.mrb[0].mxu0
    %v359 = vadd.f32 %v158, %v358
    %v360 = vpop.f32.mrb[0].mxu0
    %v361 = vadd.f32 %v158, %v360
    %362 = vdwg.mxu0
    %363 = vmatprep.subr.bf16.mxu0 %v236
    %364 = vmatpush1.bf16.msra.mxu0 %v233
    %365 = vmatprep.subr.bf16.mxu0 0
    %366 = vmatpush1.bf16.msra.mxu0 0
    %367 = vmatprep.subr.bf16.mxu0 0
    %368 = vmatpush1.bf16.msra.mxu0 0
    %369 = vmatprep.subr.bf16.mxu0 0
    %370 = vmatpush1.bf16.msra.mxu0 0
    %371 = vmatprep.subr.bf16.mxu0 0
    %372 = vmatpush1.bf16.msra.mxu0 0
    %373 = vmatprep.subr.bf16.mxu0 0
    %374 = vmatpush1.bf16.msra.mxu0 0
    %375 = vmatprep.subr.bf16.mxu0 0
    %376 = vmatpush1.bf16.msra.mxu0 0
    %377 = vmatprep.subr.bf16.mxu0 0
    %378 = vmatpush1.bf16.msra.mxu0 0
    %379 = vmatprep.subr.bf16.mxu0 0
    %380 = vmatpush1.bf16.msra.mxu0 0
    %381 = vmatprep.subr.bf16.mxu0 0
    %382 = vmatpush1.bf16.msra.mxu0 0
    %383 = vmatprep.subr.bf16.mxu0 0
    %384 = vmatpush1.bf16.msra.mxu0 0
    %385 = vmatprep.subr.bf16.mxu0 0
    %386 = vmatpush1.bf16.msra.mxu0 0
    %387 = vmatprep.subr.bf16.mxu0 0
    %388 = vmatpush1.bf16.msra.mxu0 0
    %389 = vmatprep.subr.bf16.mxu0 0
    %390 = vmatpush1.bf16.msra.mxu0 0
    %391 = vmatprep.subr.bf16.mxu0 0
    %392 = vmatpush1.bf16.msra.mxu0 0
    %393 = vmatprep.subr.bf16.mxu0 0
    %394 = vmatpush1.bf16.msra.mxu0 0
    %395 = vmatprep.mubr.bf16.mxu0 0
    %396 = vmatmul.mubr.bf16.gmra.mrb[0].mxu0 %v202
    %v397 = vpop.f32.mrb[0].mxu0
    %v398 = vadd.f32 %v83, %v397
    %v399 = vpop.f32.mrb[0].mxu0
    %v400 = vadd.f32 %v83, %v399
    %v401 = vpop.f32.mrb[0].mxu0
    %v402 = vadd.f32 %v88, %v401
    %v403 = vpop.f32.mrb[0].mxu0
    %v404 = vadd.f32 %v88, %v403
    %405 = vmatprep.mubr.bf16.mxu0 0
    %406 = vmatmul.mubr.bf16.gmra.mrb[0].mxu0 %v205
    %v407 = vpop.f32.mrb[0].mxu0
    %v408 = vadd.f32 %v93, %v407
    %v409 = vpop.f32.mrb[0].mxu0
    %v410 = vadd.f32 %v93, %v409
    %v411 = vpop.f32.mrb[0].mxu0
    %v412 = vadd.f32 %v98, %v411
    %v413 = vpop.f32.mrb[0].mxu0
    %v414 = vadd.f32 %v98, %v413
    %415 = vmatprep.mubr.bf16.mxu0 0
    %416 = vmatmul.mubr.bf16.gmra.mrb[0].mxu0 %v208
    %v417 = vpop.f32.mrb[0].mxu0
    %v418 = vadd.f32 %v103, %v417
    %v419 = vpop.f32.mrb[0].mxu0
    %v420 = vadd.f32 %v103, %v419
    %v421 = vpop.f32.mrb[0].mxu0
    %v422 = vadd.f32 %v108, %v421
    %v423 = vpop.f32.mrb[0].mxu0
    %v424 = vadd.f32 %v108, %v423
    %425 = vmatprep.mubr.bf16.mxu0 0
    %426 = vmatmul.mubr.bf16.gmra.mrb[0].mxu0 %v211
    %v427 = vpop.f32.mrb[0].mxu0
    %v428 = vadd.f32 %v113, %v427
    %v429 = vpop.f32.mrb[0].mxu0
    %v430 = vadd.f32 %v113, %v429
    %v431 = vpop.f32.mrb[0].mxu0
    %v432 = vadd.f32 %v118, %v431
    %v433 = vpop.f32.mrb[0].mxu0
    %v434 = vadd.f32 %v118, %v433
    %435 = vmatprep.mubr.bf16.mxu0 0
    %436 = vmatmul.mubr.bf16.gmra.mrb[0].mxu0 %v214
    %v437 = vpop.f32.mrb[0].mxu0
    %v438 = vadd.f32 %v123, %v437
    %v439 = vpop.f32.mrb[0].mxu0
    %v440 = vadd.f32 %v123, %v439
    %v441 = vpop.f32.mrb[0].mxu0
    %v442 = vadd.f32 %v128, %v441
    %v443 = vpop.f32.mrb[0].mxu0
    %v444 = vadd.f32 %v128, %v443
    %445 = vmatprep.mubr.bf16.mxu0 0
    %446 = vmatmul.mubr.bf16.gmra.mrb[0].mxu0 %v217
    %v447 = vpop.f32.mrb[0].mxu0
    %v448 = vadd.f32 %v133, %v447
    %v449 = vpop.f32.mrb[0].mxu0
    %v450 = vadd.f32 %v133, %v449
    %v451 = vpop.f32.mrb[0].mxu0
    %v452 = vadd.f32 %v138, %v451
    %v453 = vpop.f32.mrb[0].mxu0
    %v454 = vadd.f32 %v138, %v453
    %455 = vmatprep.mubr.bf16.mxu0 0
    %456 = vmatmul.mubr.bf16.gmra.mrb[0].mxu0 %v220
    %v457 = vpop.f32.mrb[0].mxu0
    %v458 = vadd.f32 %v143, %v457
    %v459 = vpop.f32.mrb[0].mxu0
    %v460 = vadd.f32 %v143, %v459
    %v461 = vpop.f32.mrb[0].mxu0
    %v462 = vadd.f32 %v148, %v461
    %v463 = vpop.f32.mrb[0].mxu0
    %v464 = vadd.f32 %v148, %v463
    %465 = vmatprep.mubr.bf16.mxu0 0
    %466 = vmatmul.mubr.bf16.gmra.mrb[0].mxu0 %v223
    %v467 = vpop.f32.mrb[0].mxu0
    %v468 = vadd.f32 %v153, %v467
    %v469 = vpop.f32.mrb[0].mxu0
    %v470 = vadd.f32 %v153, %v469
    %v471 = vpop.f32.mrb[0].mxu0
    %v472 = vadd.f32 %v158, %v471
    %v473 = vpop.f32.mrb[0].mxu0
    %v474 = vadd.f32 %v158, %v473
    %475 = vdwg.mxu0
    %476 = vmatprep.subr.bf16.mxu0 %v242
    %477 = vmatpush1.bf16.msra.mxu0 %v239
    %478 = vmatprep.subr.bf16.mxu0 0
    %479 = vmatpush1.bf16.msra.mxu0 0
    %480 = vmatprep.subr.bf16.mxu0 0
    %481 = vmatpush1.bf16.msra.mxu0 0
    %482 = vmatprep.subr.bf16.mxu0 0
    %483 = vmatpush1.bf16.msra.mxu0 0
    %484 = vmatprep.subr.bf16.mxu0 0
    %485 = vmatpush1.bf16.msra.mxu0 0
    %486 = vmatprep.subr.bf16.mxu0 0
    %487 = vmatpush1.bf16.msra.mxu0 0
    %488 = vmatprep.subr.bf16.mxu0 0
    %489 = vmatpush1.bf16.msra.mxu0 0
    %490 = vmatprep.subr.bf16.mxu0 0
    %491 = vmatpush1.bf16.msra.mxu0 0
    %492 = vmatprep.subr.bf16.mxu0 0
    %493 = vmatpush1.bf16.msra.mxu0 0
    %494 = vmatprep.subr.bf16.mxu0 0
    %495 = vmatpush1.bf16.msra.mxu0 0
    %496 = vmatprep.subr.bf16.mxu0 0
    %497 = vmatpush1.bf16.msra.mxu0 0
    %498 = vmatprep.subr.bf16.mxu0 0
    %499 = vmatpush1.bf16.msra.mxu0 0
    %500 = vmatprep.subr.bf16.mxu0 0
    %501 = vmatpush1.bf16.msra.mxu0 0
    %502 = vmatprep.subr.bf16.mxu0 0
    %503 = vmatpush1.bf16.msra.mxu0 0
    %504 = vmatprep.subr.bf16.mxu0 0
    %505 = vmatpush1.bf16.msra.mxu0 0
    %506 = vmatprep.subr.bf16.mxu0 0
    %507 = vmatpush1.bf16.msra.mxu0 0
    %508 = vmatprep.mubr.bf16.mxu0 0
    %509 = vmatmul.mubr.bf16.gmra.mrb[0].mxu0 %v202
    %v510 = vpop.f32.mrb[0].mxu0
    %v511 = vadd.f32 %v83, %v510
    %v512 = vpop.f32.mrb[0].mxu0
    %v513 = vadd.f32 %v83, %v512
    %v514 = vpop.f32.mrb[0].mxu0
    %v515 = vadd.f32 %v88, %v514
    %v516 = vpop.f32.mrb[0].mxu0
    %v517 = vadd.f32 %v88, %v516
    %518 = vmatprep.mubr.bf16.mxu0 0
    %519 = vmatmul.mubr.bf16.gmra.mrb[0].mxu0 %v205
    %v520 = vpop.f32.mrb[0].mxu0
    %v521 = vadd.f32 %v93, %v520
    %v522 = vpop.f32.mrb[0].mxu0
    %v523 = vadd.f32 %v93, %v522
    %v524 = vpop.f32.mrb[0].mxu0
    %v525 = vadd.f32 %v98, %v524
    %v526 = vpop.f32.mrb[0].mxu0
    %v527 = vadd.f32 %v98, %v526
    %528 = vmatprep.mubr.bf16.mxu0 0
    %529 = vmatmul.mubr.bf16.gmra.mrb[0].mxu0 %v208
    %v530 = vpop.f32.mrb[0].mxu0
    %v531 = vadd.f32 %v103, %v530
    %v532 = vpop.f32.mrb[0].mxu0
    %v533 = vadd.f32 %v103, %v532
    %v534 = vpop.f32.mrb[0].mxu0
    %v535 = vadd.f32 %v108, %v534
    %v536 = vpop.f32.mrb[0].mxu0
    %v537 = vadd.f32 %v108, %v536
    %538 = vmatprep.mubr.bf16.mxu0 0
    %539 = vmatmul.mubr.bf16.gmra.mrb[0].mxu0 %v211
    %v540 = vpop.f32.mrb[0].mxu0
    %v541 = vadd.f32 %v113, %v540
    %v542 = vpop.f32.mrb[0].mxu0
    %v543 = vadd.f32 %v113, %v542
    %v544 = vpop.f32.mrb[0].mxu0
    %v545 = vadd.f32 %v118, %v544
    %v546 = vpop.f32.mrb[0].mxu0
    %v547 = vadd.f32 %v118, %v546
    %548 = vmatprep.mubr.bf16.mxu0 0
    %549 = vmatmul.mubr.bf16.gmra.mrb[0].mxu0 %v214
    %v550 = vpop.f32.mrb[0].mxu0
    %v551 = vadd.f32 %v123, %v550
    %v552 = vpop.f32.mrb[0].mxu0
    %v553 = vadd.f32 %v123, %v552
    %v554 = vpop.f32.mrb[0].mxu0
    %v555 = vadd.f32 %v128, %v554
    %v556 = vpop.f32.mrb[0].mxu0
    %v557 = vadd.f32 %v128, %v556
    %558 = vmatprep.mubr.bf16.mxu0 0
    %559 = vmatmul.mubr.bf16.gmra.mrb[0].mxu0 %v217
    %v560 = vpop.f32.mrb[0].mxu0
    %v561 = vadd.f32 %v133, %v560
    %v562 = vpop.f32.mrb[0].mxu0
    %v563 = vadd.f32 %v133, %v562
    %v564 = vpop.f32.mrb[0].mxu0
    %v565 = vadd.f32 %v138, %v564
    %v566 = vpop.f32.mrb[0].mxu0
    %v567 = vadd.f32 %v138, %v566
    %568 = vmatprep.mubr.bf16.mxu0 0
    %569 = vmatmul.mubr.bf16.gmra.mrb[0].mxu0 %v220
    %v570 = vpop.f32.mrb[0].mxu0
    %v571 = vadd.f32 %v143, %v570
    %v572 = vpop.f32.mrb[0].mxu0
    %v573 = vadd.f32 %v143, %v572
    %v574 = vpop.f32.mrb[0].mxu0
    %v575 = vadd.f32 %v148, %v574
    %v576 = vpop.f32.mrb[0].mxu0
    %v577 = vadd.f32 %v148, %v576
    %578 = vmatprep.mubr.bf16.mxu0 0
    %579 = vmatmul.mubr.bf16.gmra.mrb[0].mxu0 %v223
    %v580 = vpop.f32.mrb[0].mxu0
    %v581 = vadd.f32 %v153, %v580
    %v582 = vpop.f32.mrb[0].mxu0
    %v583 = vadd.f32 %v153, %v582
    %v584 = vpop.f32.mrb[0].mxu0
    %v585 = vadd.f32 %v158, %v584
    %v586 = vpop.f32.mrb[0].mxu0
    %v587 = vadd.f32 %v158, %v586
    %588 = vdwg.mxu0
    %589 = vmatprep.subr.bf16.mxu0 %v248
    %590 = vmatpush1.bf16.msra.mxu0 %v245
    %591 = vmatprep.subr.bf16.mxu0 0
    %592 = vmatpush1.bf16.msra.mxu0 0
    %593 = vmatprep.subr.bf16.mxu0 0
    %594 = vmatpush1.bf16.msra.mxu0 0
    %595 = vmatprep.subr.bf16.mxu0 0
    %596 = vmatpush1.bf16.msra.mxu0 0
    %597 = vmatprep.subr.bf16.mxu0 0
    %598 = vmatpush1.bf16.msra.mxu0 0
    %599 = vmatprep.subr.bf16.mxu0 0
    %600 = vmatpush1.bf16.msra.mxu0 0
    %601 = vmatprep.subr.bf16.mxu0 0
    %602 = vmatpush1.bf16.msra.mxu0 0
    %603 = vmatprep.subr.bf16.mxu0 0
    %604 = vmatpush1.bf16.msra.mxu0 0
    %605 = vmatprep.subr.bf16.mxu0 0
    %606 = vmatpush1.bf16.msra.mxu0 0
    %607 = vmatprep.subr.bf16.mxu0 0
    %608 = vmatpush1.bf16.msra.mxu0 0
    %609 = vmatprep.subr.bf16.mxu0 0
    %610 = vmatpush1.bf16.msra.mxu0 0
    %611 = vmatprep.subr.bf16.mxu0 0
    %612 = vmatpush1.bf16.msra.mxu0 0
    %613 = vmatprep.subr.bf16.mxu0 0
    %614 = vmatpush1.bf16.msra.mxu0 0
    %615 = vmatprep.subr.bf16.mxu0 0
    %616 = vmatpush1.bf16.msra.mxu0 0
    %617 = vmatprep.subr.bf16.mxu0 0
    %618 = vmatpush1.bf16.msra.mxu0 0
    %619 = vmatprep.subr.bf16.mxu0 0
    %620 = vmatpush1.bf16.msra.mxu0 0
    %621 = vmatprep.mubr.bf16.mxu0 0
    %622 = vmatmul.mubr.bf16.gmra.mrb[0].mxu0 %v202
    %v623 = vpop.f32.mrb[0].mxu0
    %v624 = vadd.f32 %v83, %v623
    %v625 = vpop.f32.mrb[0].mxu0
    %v626 = vadd.f32 %v83, %v625
    %v627 = vpop.f32.mrb[0].mxu0
    %v628 = vadd.f32 %v88, %v627
    %v629 = vpop.f32.mrb[0].mxu0
    %v630 = vadd.f32 %v88, %v629
    %631 = vmatprep.mubr.bf16.mxu0 0
    %632 = vmatmul.mubr.bf16.gmra.mrb[0].mxu0 %v205
    %v633 = vpop.f32.mrb[0].mxu0
    %v634 = vadd.f32 %v93, %v633
    %v635 = vpop.f32.mrb[0].mxu0
    %v636 = vadd.f32 %v93, %v635
    %v637 = vpop.f32.mrb[0].mxu0
    %v638 = vadd.f32 %v98, %v637
    %v639 = vpop.f32.mrb[0].mxu0
    %v640 = vadd.f32 %v98, %v639
    %641 = vmatprep.mubr.bf16.mxu0 0
    %642 = vmatmul.mubr.bf16.gmra.mrb[0].mxu0 %v208
    %v643 = vpop.f32.mrb[0].mxu0
    %v644 = vadd.f32 %v103, %v643
    %v645 = vpop.f32.mrb[0].mxu0
    %v646 = vadd.f32 %v103, %v645
    %v647 = vpop.f32.mrb[0].mxu0
    %v648 = vadd.f32 %v108, %v647
    %v649 = vpop.f32.mrb[0].mxu0
    %v650 = vadd.f32 %v108, %v649
    %651 = vmatprep.mubr.bf16.mxu0 0
    %652 = vmatmul.mubr.bf16.gmra.mrb[0].mxu0 %v211
    %v653 = vpop.f32.mrb[0].mxu0
    %v654 = vadd.f32 %v113, %v653
    %v655 = vpop.f32.mrb[0].mxu0
    %v656 = vadd.f32 %v113, %v655
    %v657 = vpop.f32.mrb[0].mxu0
    %v658 = vadd.f32 %v118, %v657
    %v659 = vpop.f32.mrb[0].mxu0
    %v660 = vadd.f32 %v118, %v659
    %661 = vmatprep.mubr.bf16.mxu0 0
    %662 = vmatmul.mubr.bf16.gmra.mrb[0].mxu0 %v214
    %v663 = vpop.f32.mrb[0].mxu0
    %v664 = vadd.f32 %v123, %v663
    %v665 = vpop.f32.mrb[0].mxu0
    %v666 = vadd.f32 %v123, %v665
    %v667 = vpop.f32.mrb[0].mxu0
    %v668 = vadd.f32 %v128, %v667
    %v669 = vpop.f32.mrb[0].mxu0
    %v670 = vadd.f32 %v128, %v669
    %671 = vmatprep.mubr.bf16.mxu0 0
    %672 = vmatmul.mubr.bf16.gmra.mrb[0].mxu0 %v217
    %v673 = vpop.f32.mrb[0].mxu0
    %v674 = vadd.f32 %v133, %v673
    %v675 = vpop.f32.mrb[0].mxu0
    %v676 = vadd.f32 %v133, %v675
    %v677 = vpop.f32.mrb[0].mxu0
    %v678 = vadd.f32 %v138, %v677
    %v679 = vpop.f32.mrb[0].mxu0
    %v680 = vadd.f32 %v138, %v679
    %681 = vmatprep.mubr.bf16.mxu0 0
    %682 = vmatmul.mubr.bf16.gmra.mrb[0].mxu0 %v220
    %v683 = vpop.f32.mrb[0].mxu0
    %v684 = vadd.f32 %v143, %v683
    %v685 = vpop.f32.mrb[0].mxu0
    %v686 = vadd.f32 %v143, %v685
    %v687 = vpop.f32.mrb[0].mxu0
    %v688 = vadd.f32 %v148, %v687
    %v689 = vpop.f32.mrb[0].mxu0
    %v690 = vadd.f32 %v148, %v689
    %691 = vmatprep.mubr.bf16.mxu0 0
    %692 = vmatmul.mubr.bf16.gmra.mrb[0].mxu0 %v223
    %v693 = vpop.f32.mrb[0].mxu0
    %v694 = vadd.f32 %v153, %v693
    %v695 = vpop.f32.mrb[0].mxu0
    %v696 = vadd.f32 %v153, %v695
    %v697 = vpop.f32.mrb[0].mxu0
    %v698 = vadd.f32 %v158, %v697
    %v699 = vpop.f32.mrb[0].mxu0
    %v700 = vadd.f32 %v158, %v699
    %701 = vdwg.mxu0
    %v702 = vmax.f32 %v285, 0.0
    %v703 = vmax.f32 %v287, 0.0
    %v704 = vmax.f32 %v398, 0.0
    %v705 = vmax.f32 %v400, 0.0
    %v706 = vmax.f32 %v511, 0.0
    %v707 = vmax.f32 %v513, 0.0
    %v708 = vmax.f32 %v624, 0.0
    %v709 = vmax.f32 %v626, 0.0
    %v710 = vmax.f32 %v289, 0.0
    %v711 = vmax.f32 %v291, 0.0
    %v712 = vmax.f32 %v402, 0.0
    %v713 = vmax.f32 %v404, 0.0
    %v714 = vmax.f32 %v515, 0.0
    %v715 = vmax.f32 %v517, 0.0
    %v716 = vmax.f32 %v628, 0.0
    %v717 = vmax.f32 %v630, 0.0
    %v718 = vmax.f32 %v295, 0.0
    %v719 = vmax.f32 %v297, 0.0
    %v720 = vmax.f32 %v408, 0.0
    %v721 = vmax.f32 %v410, 0.0
    %v722 = vmax.f32 %v521, 0.0
    %v723 = vmax.f32 %v523, 0.0
    %v724 = vmax.f32 %v634, 0.0
    %v725 = vmax.f32 %v636, 0.0
    %v726 = vmax.f32 %v299, 0.0
    %v727 = vmax.f32 %v301, 0.0
    %v728 = vmax.f32 %v412, 0.0
    %v729 = vmax.f32 %v414, 0.0
    %v730 = vmax.f32 %v525, 0.0
    %v731 = vmax.f32 %v527, 0.0
    %v732 = vmax.f32 %v638, 0.0
    %v733 = vmax.f32 %v640, 0.0
    %v734 = vmax.f32 %v305, 0.0
    %v735 = vmax.f32 %v307, 0.0
    %v736 = vmax.f32 %v418, 0.0
    %v737 = vmax.f32 %v420, 0.0
    %v738 = vmax.f32 %v531, 0.0
    %v739 = vmax.f32 %v533, 0.0
    %v740 = vmax.f32 %v644, 0.0
    %v741 = vmax.f32 %v646, 0.0
    %v742 = vmax.f32 %v309, 0.0
    %v743 = vmax.f32 %v311, 0.0
    %v744 = vmax.f32 %v422, 0.0
    %v745 = vmax.f32 %v424, 0.0
    %v746 = vmax.f32 %v535, 0.0
    %v747 = vmax.f32 %v537, 0.0
    %v748 = vmax.f32 %v648, 0.0
    %v749 = vmax.f32 %v650, 0.0
    %v750 = vmax.f32 %v315, 0.0
    %v751 = vmax.f32 %v317, 0.0
    %v752 = vmax.f32 %v428, 0.0
    %v753 = vmax.f32 %v430, 0.0
    %v754 = vmax.f32 %v541, 0.0
    %v755 = vmax.f32 %v543, 0.0
    %v756 = vmax.f32 %v654, 0.0
    %v757 = vmax.f32 %v656, 0.0
    %v758 = vmax.f32 %v319, 0.0
    %v759 = vmax.f32 %v321, 0.0
    %v760 = vmax.f32 %v432, 0.0
    %v761 = vmax.f32 %v434, 0.0
    %v762 = vmax.f32 %v545, 0.0
    %v763 = vmax.f32 %v547, 0.0
    %v764 = vmax.f32 %v658, 0.0
    %v765 = vmax.f32 %v660, 0.0
    %v766 = vmax.f32 %v325, 0.0
    %v767 = vmax.f32 %v327, 0.0
    %v768 = vmax.f32 %v438, 0.0
    %v769 = vmax.f32 %v440, 0.0
    %v770 = vmax.f32 %v551, 0.0
    %v771 = vmax.f32 %v553, 0.0
    %v772 = vmax.f32 %v664, 0.0
    %v773 = vmax.f32 %v666, 0.0
    %v774 = vmax.f32 %v329, 0.0
    %v775 = vmax.f32 %v331, 0.0
    %v776 = vmax.f32 %v442, 0.0
    %v777 = vmax.f32 %v444, 0.0
    %v778 = vmax.f32 %v555, 0.0
    %v779 = vmax.f32 %v557, 0.0
    %v780 = vmax.f32 %v668, 0.0
    %v781 = vmax.f32 %v670, 0.0
    %v782 = vmax.f32 %v335, 0.0
    %v783 = vmax.f32 %v337, 0.0
    %v784 = vmax.f32 %v448, 0.0
    %v785 = vmax.f32 %v450, 0.0
    %v786 = vmax.f32 %v561, 0.0
    %v787 = vmax.f32 %v563, 0.0
    %v788 = vmax.f32 %v674, 0.0
    %v789 = vmax.f32 %v676, 0.0
    %v790 = vmax.f32 %v339, 0.0
    %v791 = vmax.f32 %v341, 0.0
    %v792 = vmax.f32 %v452, 0.0
    %v793 = vmax.f32 %v454, 0.0
    %v794 = vmax.f32 %v565, 0.0
    %v795 = vmax.f32 %v567, 0.0
    %v796 = vmax.f32 %v678, 0.0
    %v797 = vmax.f32 %v680, 0.0
    %v798 = vmax.f32 %v345, 0.0
    %v799 = vmax.f32 %v347, 0.0
    %v800 = vmax.f32 %v458, 0.0
    %v801 = vmax.f32 %v460, 0.0
    %v802 = vmax.f32 %v571, 0.0
    %v803 = vmax.f32 %v573, 0.0
    %v804 = vmax.f32 %v684, 0.0
    %v805 = vmax.f32 %v686, 0.0
    %v806 = vmax.f32 %v349, 0.0
    %v807 = vmax.f32 %v351, 0.0
    %v808 = vmax.f32 %v462, 0.0
    %v809 = vmax.f32 %v464, 0.0
    %v810 = vmax.f32 %v575, 0.0
    %v811 = vmax.f32 %v577, 0.0
    %v812 = vmax.f32 %v688, 0.0
    %v813 = vmax.f32 %v690, 0.0
    %v814 = vmax.f32 %v355, 0.0
    %v815 = vmax.f32 %v357, 0.0
    %v816 = vmax.f32 %v468, 0.0
    %v817 = vmax.f32 %v470, 0.0
    %v818 = vmax.f32 %v581, 0.0
    %v819 = vmax.f32 %v583, 0.0
    %v820 = vmax.f32 %v694, 0.0
    %v821 = vmax.f32 %v696, 0.0
    %v822 = vmax.f32 %v359, 0.0
    %v823 = vmax.f32 %v361, 0.0
    %v824 = vmax.f32 %v472, 0.0
    %v825 = vmax.f32 %v474, 0.0
    %v826 = vmax.f32 %v585, 0.0
    %v827 = vmax.f32 %v587, 0.0
    %v828 = vmax.f32 %v698, 0.0
    %v829 = vmax.f32 %v700, 0.0
    %v830 = vld [vmem:[%s3] sm:$0xff]
    %v831 = vld [vmem:[%s3 + $0x8] sm:$0xff]
    %v832 = vld [vmem:[%s3 + $0x10] sm:$0xff]
    %v833 = vld [vmem:[%s3 + $0x18] sm:$0xff]
    %v834 = vld [vmem:[%s3 + $0x20] sm:$0xff]
    %v835 = vld [vmem:[%s3 + $0x28] sm:$0xff]
    %v836 = vld [vmem:[%s3 + $0x30] sm:$0xff]
    %v837 = vld [vmem:[%s3 + $0x38] sm:$0xff]
    %v838 = vld [vmem:[%s3 + $0x40] sm:$0xff]
    %v839 = vld [vmem:[%s3 + $0x48] sm:$0xff]
    %v840 = vld [vmem:[%s3 + $0x50] sm:$0xff]
    %v841 = vld [vmem:[%s3 + $0x58] sm:$0xff]
    %v842 = vld [vmem:[%s3 + $0x60] sm:$0xff]
    %v843 = vld [vmem:[%s3 + $0x68] sm:$0xff]
    %v844 = vld [vmem:[%s3 + $0x70] sm:$0xff]
    %v845 = vld [vmem:[%s3 + $0x78] sm:$0xff]
    %847 = vset.pattern.permute.xlu0 0
    %848 = vperm.xlu0 %847, %v830
    %v849 = vpop.permute.xlu0 %848
    %852 = vset.pattern.permute.xlu0 0
    %853 = vperm.xlu0 %852, %v831
    %v854 = vpop.permute.xlu0 %853
    %857 = vset.pattern.permute.xlu0 0
    %858 = vperm.xlu0 %857, %v832
    %v859 = vpop.permute.xlu0 %858
    %862 = vset.pattern.permute.xlu0 0
    %863 = vperm.xlu0 %862, %v833
    %v864 = vpop.permute.xlu0 %863
    %867 = vset.pattern.permute.xlu0 0
    %868 = vperm.xlu0 %867, %v834
    %v869 = vpop.permute.xlu0 %868
    %872 = vset.pattern.permute.xlu0 0
    %873 = vperm.xlu0 %872, %v835
    %v874 = vpop.permute.xlu0 %873
    %877 = vset.pattern.permute.xlu0 0
    %878 = vperm.xlu0 %877, %v836
    %v879 = vpop.permute.xlu0 %878
    %882 = vset.pattern.permute.xlu0 0
    %883 = vperm.xlu0 %882, %v837
    %v884 = vpop.permute.xlu0 %883
    %887 = vset.pattern.permute.xlu0 0
    %888 = vperm.xlu0 %887, %v838
    %v889 = vpop.permute.xlu0 %888
    %892 = vset.pattern.permute.xlu0 0
    %893 = vperm.xlu0 %892, %v839
    %v894 = vpop.permute.xlu0 %893
    %897 = vset.pattern.permute.xlu0 0
    %898 = vperm.xlu0 %897, %v840
    %v899 = vpop.permute.xlu0 %898
    %902 = vset.pattern.permute.xlu0 0
    %903 = vperm.xlu0 %902, %v841
    %v904 = vpop.permute.xlu0 %903
    %907 = vset.pattern.permute.xlu0 0
    %908 = vperm.xlu0 %907, %v842
    %v909 = vpop.permute.xlu0 %908
    %912 = vset.pattern.permute.xlu0 0
    %913 = vperm.xlu0 %912, %v843
    %v914 = vpop.permute.xlu0 %913
    %917 = vset.pattern.permute.xlu0 0
    %918 = vperm.xlu0 %917, %v844
    %v919 = vpop.permute.xlu0 %918
    %922 = vset.pattern.permute.xlu0 0
    %923 = vperm.xlu0 %922, %v845
    %v924 = vpop.permute.xlu0 %923
    %v926 = vmul.f32 %v702, %v849
    %v927 = vmul.f32 %v703, %v849
    %v928 = vmul.f32 %v704, %v849
    %v929 = vmul.f32 %v705, %v849
    %v930 = vmul.f32 %v706, %v849
    %v931 = vmul.f32 %v707, %v849
    %v932 = vmul.f32 %v708, %v849
    %v933 = vmul.f32 %v709, %v849
    %v934 = vmul.f32 %v710, %v854
    %v935 = vmul.f32 %v711, %v854
    %v936 = vmul.f32 %v712, %v854
    %v937 = vmul.f32 %v713, %v854
    %v938 = vmul.f32 %v714, %v854
    %v939 = vmul.f32 %v715, %v854
    %v940 = vmul.f32 %v716, %v854
    %v941 = vmul.f32 %v717, %v854
    %v942 = vmul.f32 %v718, %v859
    %v943 = vmul.f32 %v719, %v859
    %v944 = vmul.f32 %v720, %v859
    %v945 = vmul.f32 %v721, %v859
    %v946 = vmul.f32 %v722, %v859
    %v947 = vmul.f32 %v723, %v859
    %v948 = vmul.f32 %v724, %v859
    %v949 = vmul.f32 %v725, %v859
    %v950 = vmul.f32 %v726, %v864
    %v951 = vmul.f32 %v727, %v864
    %v952 = vmul.f32 %v728, %v864
    %v953 = vmul.f32 %v729, %v864
    %v954 = vmul.f32 %v730, %v864
    %v955 = vmul.f32 %v731, %v864
    %v956 = vmul.f32 %v732, %v864
    %v957 = vmul.f32 %v733, %v864
    %v958 = vmul.f32 %v734, %v869
    %v959 = vmul.f32 %v735, %v869
    %v960 = vmul.f32 %v736, %v869
    %v961 = vmul.f32 %v737, %v869
    %v962 = vmul.f32 %v738, %v869
    %v963 = vmul.f32 %v739, %v869
    %v964 = vmul.f32 %v740, %v869
    %v965 = vmul.f32 %v741, %v869
    %v966 = vmul.f32 %v742, %v874
    %v967 = vmul.f32 %v743, %v874
    %v968 = vmul.f32 %v744, %v874
    %v969 = vmul.f32 %v745, %v874
    %v970 = vmul.f32 %v746, %v874
    %v971 = vmul.f32 %v747, %v874
    %v972 = vmul.f32 %v748, %v874
    %v973 = vmul.f32 %v749, %v874
    %v974 = vmul.f32 %v750, %v879
    %v975 = vmul.f32 %v751, %v879
    %v976 = vmul.f32 %v752, %v879
    %v977 = vmul.f32 %v753, %v879
    %v978 = vmul.f32 %v754, %v879
    %v979 = vmul.f32 %v755, %v879
    %v980 = vmul.f32 %v756, %v879
    %v981 = vmul.f32 %v757, %v879
    %v982 = vmul.f32 %v758, %v884
    %v983 = vmul.f32 %v759, %v884
    %v984 = vmul.f32 %v760, %v884
    %v985 = vmul.f32 %v761, %v884
    %v986 = vmul.f32 %v762, %v884
    %v987 = vmul.f32 %v763, %v884
    %v988 = vmul.f32 %v764, %v884
    %v989 = vmul.f32 %v765, %v884
    %v990 = vmul.f32 %v766, %v889
    %v991 = vmul.f32 %v767, %v889
    %v992 = vmul.f32 %v768, %v889
    %v993 = vmul.f32 %v769, %v889
    %v994 = vmul.f32 %v770, %v889
    %v995 = vmul.f32 %v771, %v889
    %v996 = vmul.f32 %v772, %v889
    %v997 = vmul.f32 %v773, %v889
    %v998 = vmul.f32 %v774, %v894
    %v999 = vmul.f32 %v775, %v894
    %v1000 = vmul.f32 %v776, %v894
    %v1001 = vmul.f32 %v777, %v894
    %v1002 = vmul.f32 %v778, %v894
    %v1003 = vmul.f32 %v779, %v894
    %v1004 = vmul.f32 %v780, %v894
    %v1005 = vmul.f32 %v781, %v894
    %v1006 = vmul.f32 %v782, %v899
    %v1007 = vmul.f32 %v783, %v899
    %v1008 = vmul.f32 %v784, %v899
    %v1009 = vmul.f32 %v785, %v899
    %v1010 = vmul.f32 %v786, %v899
    %v1011 = vmul.f32 %v787, %v899
    %v1012 = vmul.f32 %v788, %v899
    %v1013 = vmul.f32 %v789, %v899
    %v1014 = vmul.f32 %v790, %v904
    %v1015 = vmul.f32 %v791, %v904
    %v1016 = vmul.f32 %v792, %v904
    %v1017 = vmul.f32 %v793, %v904
    %v1018 = vmul.f32 %v794, %v904
    %v1019 = vmul.f32 %v795, %v904
    %v1020 = vmul.f32 %v796, %v904
    %v1021 = vmul.f32 %v797, %v904
    %v1022 = vmul.f32 %v798, %v909
    %v1023 = vmul.f32 %v799, %v909
    %v1024 = vmul.f32 %v800, %v909
    %v1025 = vmul.f32 %v801, %v909
    %v1026 = vmul.f32 %v802, %v909
    %v1027 = vmul.f32 %v803, %v909
    %v1028 = vmul.f32 %v804, %v909
    %v1029 = vmul.f32 %v805, %v909
    %v1030 = vmul.f32 %v806, %v914
    %v1031 = vmul.f32 %v807, %v914
    %v1032 = vmul.f32 %v808, %v914
    %v1033 = vmul.f32 %v809, %v914
    %v1034 = vmul.f32 %v810, %v914
    %v1035 = vmul.f32 %v811, %v914
    %v1036 = vmul.f32 %v812, %v914
    %v1037 = vmul.f32 %v813, %v914
    %v1038 = vmul.f32 %v814, %v919
    %v1039 = vmul.f32 %v815, %v919
    %v1040 = vmul.f32 %v816, %v919
    %v1041 = vmul.f32 %v817, %v919
    %v1042 = vmul.f32 %v818, %v919
    %v1043 = vmul.f32 %v819, %v919
    %v1044 = vmul.f32 %v820, %v919
    %v1045 = vmul.f32 %v821, %v919
    %v1046 = vmul.f32 %v822, %v924
    %v1047 = vmul.f32 %v823, %v924
    %v1048 = vmul.f32 %v824, %v924
    %v1049 = vmul.f32 %v825, %v924
    %v1050 = vmul.f32 %v826, %v924
    %v1051 = vmul.f32 %v827, %v924
    %v1052 = vmul.f32 %v828, %v924
    %v1053 = vmul.f32 %v829, %v924
    %v1054 = vadd.f32 %v926, %v934
    %v1055 = vadd.f32 %v1054, %v942
    %v1056 = vadd.f32 %v1055, %v950
    %v1057 = vadd.f32 %v1056, %v958
    %v1058 = vadd.f32 %v1057, %v966
    %v1059 = vadd.f32 %v1058, %v974
    %v1060 = vadd.f32 %v1059, %v982
    %v1061 = vadd.f32 %v1060, %v990
    %v1062 = vadd.f32 %v1061, %v998
    %v1063 = vadd.f32 %v1062, %v1006
    %v1064 = vadd.f32 %v1063, %v1014
    %v1065 = vadd.f32 %v1064, %v1022
    %v1066 = vadd.f32 %v1065, %v1030
    %v1067 = vadd.f32 %v1066, %v1038
    %v1068 = vadd.f32 %v1067, %v1046
    %v1069 = vrot.slane %v1068, 4
    %v1070 = vadd.f32 %v1068, %v1069
    %v1071 = vrot.slane %v1070, 2
    %v1072 = vadd.f32 %v1070, %v1071
    %v1073 = vrot.slane %v1072, 1
    %v1074 = vadd.f32 %v1072, %v1073
    %v1075 = vadd.f32 %v927, %v935
    %v1076 = vadd.f32 %v1075, %v943
    %v1077 = vadd.f32 %v1076, %v951
    %v1078 = vadd.f32 %v1077, %v959
    %v1079 = vadd.f32 %v1078, %v967
    %v1080 = vadd.f32 %v1079, %v975
    %v1081 = vadd.f32 %v1080, %v983
    %v1082 = vadd.f32 %v1081, %v991
    %v1083 = vadd.f32 %v1082, %v999
    %v1084 = vadd.f32 %v1083, %v1007
    %v1085 = vadd.f32 %v1084, %v1015
    %v1086 = vadd.f32 %v1085, %v1023
    %v1087 = vadd.f32 %v1086, %v1031
    %v1088 = vadd.f32 %v1087, %v1039
    %v1089 = vadd.f32 %v1088, %v1047
    %v1090 = vrot.slane %v1089, 4
    %v1091 = vadd.f32 %v1089, %v1090
    %v1092 = vrot.slane %v1091, 2
    %v1093 = vadd.f32 %v1091, %v1092
    %v1094 = vrot.slane %v1093, 1
    %v1095 = vadd.f32 %v1093, %v1094
    %v1096 = vadd.f32 %v928, %v936
    %v1097 = vadd.f32 %v1096, %v944
    %v1098 = vadd.f32 %v1097, %v952
    %v1099 = vadd.f32 %v1098, %v960
    %v1100 = vadd.f32 %v1099, %v968
    %v1101 = vadd.f32 %v1100, %v976
    %v1102 = vadd.f32 %v1101, %v984
    %v1103 = vadd.f32 %v1102, %v992
    %v1104 = vadd.f32 %v1103, %v1000
    %v1105 = vadd.f32 %v1104, %v1008
    %v1106 = vadd.f32 %v1105, %v1016
    %v1107 = vadd.f32 %v1106, %v1024
    %v1108 = vadd.f32 %v1107, %v1032
    %v1109 = vadd.f32 %v1108, %v1040
    %v1110 = vadd.f32 %v1109, %v1048
    %v1111 = vrot.slane %v1110, 4
    %v1112 = vadd.f32 %v1110, %v1111
    %v1113 = vrot.slane %v1112, 2
    %v1114 = vadd.f32 %v1112, %v1113
    %v1115 = vrot.slane %v1114, 1
    %v1116 = vadd.f32 %v1114, %v1115
    %v1117 = vadd.f32 %v929, %v937
    %v1118 = vadd.f32 %v1117, %v945
    %v1119 = vadd.f32 %v1118, %v953
    %v1120 = vadd.f32 %v1119, %v961
    %v1121 = vadd.f32 %v1120, %v969
    %v1122 = vadd.f32 %v1121, %v977
    %v1123 = vadd.f32 %v1122, %v985
    %v1124 = vadd.f32 %v1123, %v993
    %v1125 = vadd.f32 %v1124, %v1001
    %v1126 = vadd.f32 %v1125, %v1009
    %v1127 = vadd.f32 %v1126, %v1017
    %v1128 = vadd.f32 %v1127, %v1025
    %v1129 = vadd.f32 %v1128, %v1033
    %v1130 = vadd.f32 %v1129, %v1041
    %v1131 = vadd.f32 %v1130, %v1049
    %v1132 = vrot.slane %v1131, 4
    %v1133 = vadd.f32 %v1131, %v1132
    %v1134 = vrot.slane %v1133, 2
    %v1135 = vadd.f32 %v1133, %v1134
    %v1136 = vrot.slane %v1135, 1
    %v1137 = vadd.f32 %v1135, %v1136
    %v1138 = vadd.f32 %v930, %v938
    %v1139 = vadd.f32 %v1138, %v946
    %v1140 = vadd.f32 %v1139, %v954
    %v1141 = vadd.f32 %v1140, %v962
    %v1142 = vadd.f32 %v1141, %v970
    %v1143 = vadd.f32 %v1142, %v978
    %v1144 = vadd.f32 %v1143, %v986
    %v1145 = vadd.f32 %v1144, %v994
    %v1146 = vadd.f32 %v1145, %v1002
    %v1147 = vadd.f32 %v1146, %v1010
    %v1148 = vadd.f32 %v1147, %v1018
    %v1149 = vadd.f32 %v1148, %v1026
    %v1150 = vadd.f32 %v1149, %v1034
    %v1151 = vadd.f32 %v1150, %v1042
    %v1152 = vadd.f32 %v1151, %v1050
    %v1153 = vrot.slane %v1152, 4
    %v1154 = vadd.f32 %v1152, %v1153
    %v1155 = vrot.slane %v1154, 2
    %v1156 = vadd.f32 %v1154, %v1155
    %v1157 = vrot.slane %v1156, 1
    %v1158 = vadd.f32 %v1156, %v1157
    %v1159 = vadd.f32 %v931, %v939
    %v1160 = vadd.f32 %v1159, %v947
    %v1161 = vadd.f32 %v1160, %v955
    %v1162 = vadd.f32 %v1161, %v963
    %v1163 = vadd.f32 %v1162, %v971
    %v1164 = vadd.f32 %v1163, %v979
    %v1165 = vadd.f32 %v1164, %v987
    %v1166 = vadd.f32 %v1165, %v995
    %v1167 = vadd.f32 %v1166, %v1003
    %v1168 = vadd.f32 %v1167, %v1011
    %v1169 = vadd.f32 %v1168, %v1019
    %v1170 = vadd.f32 %v1169, %v1027
    %v1171 = vadd.f32 %v1170, %v1035
    %v1172 = vadd.f32 %v1171, %v1043
    %v1173 = vadd.f32 %v1172, %v1051
    %v1174 = vrot.slane %v1173, 4
    %v1175 = vadd.f32 %v1173, %v1174
    %v1176 = vrot.slane %v1175, 2
    %v1177 = vadd.f32 %v1175, %v1176
    %v1178 = vrot.slane %v1177, 1
    %v1179 = vadd.f32 %v1177, %v1178
    %v1180 = vadd.f32 %v932, %v940
    %v1181 = vadd.f32 %v1180, %v948
    %v1182 = vadd.f32 %v1181, %v956
    %v1183 = vadd.f32 %v1182, %v964
    %v1184 = vadd.f32 %v1183, %v972
    %v1185 = vadd.f32 %v1184, %v980
    %v1186 = vadd.f32 %v1185, %v988
    %v1187 = vadd.f32 %v1186, %v996
    %v1188 = vadd.f32 %v1187, %v1004
    %v1189 = vadd.f32 %v1188, %v1012
    %v1190 = vadd.f32 %v1189, %v1020
    %v1191 = vadd.f32 %v1190, %v1028
    %v1192 = vadd.f32 %v1191, %v1036
    %v1193 = vadd.f32 %v1192, %v1044
    %v1194 = vadd.f32 %v1193, %v1052
    %v1195 = vrot.slane %v1194, 4
    %v1196 = vadd.f32 %v1194, %v1195
    %v1197 = vrot.slane %v1196, 2
    %v1198 = vadd.f32 %v1196, %v1197
    %v1199 = vrot.slane %v1198, 1
    %v1200 = vadd.f32 %v1198, %v1199
    %v1201 = vadd.f32 %v933, %v941
    %v1202 = vadd.f32 %v1201, %v949
    %v1203 = vadd.f32 %v1202, %v957
    %v1204 = vadd.f32 %v1203, %v965
    %v1205 = vadd.f32 %v1204, %v973
    %v1206 = vadd.f32 %v1205, %v981
    %v1207 = vadd.f32 %v1206, %v989
    %v1208 = vadd.f32 %v1207, %v997
    %v1209 = vadd.f32 %v1208, %v1005
    %v1210 = vadd.f32 %v1209, %v1013
    %v1211 = vadd.f32 %v1210, %v1021
    %v1212 = vadd.f32 %v1211, %v1029
    %v1213 = vadd.f32 %v1212, %v1037
    %v1214 = vadd.f32 %v1213, %v1045
    %v1215 = vadd.f32 %v1214, %v1053
    %v1216 = vrot.slane %v1215, 4
    %v1217 = vadd.f32 %v1215, %v1216
    %v1218 = vrot.slane %v1217, 2
    %v1219 = vadd.f32 %v1217, %v1218
    %v1220 = vrot.slane %v1219, 1
    %v1221 = vadd.f32 %v1219, %v1220
    %v1222 = vld [vmem:[#allocation2] sm:$0x1]
    %1224 = vset.pattern.permute.xlu0 0
    %1225 = vperm.xlu0 %1224, %v1222
    %v1226 = vpop.permute.xlu0 %1225
    %v1228 = vlaneseq
    %v1229 = vshrl.u32 %v1228, 7
    %v1230 = vsub.s32 0, %v1229
    %v1231 = vrot.slane %v1226, %v1230
    %v1232 = vadd.f32 %v1074, %v1231
    %v1233 = vadd.f32 %v1095, %v1231
    %v1234 = vadd.f32 %v1116, %v1231
    %v1235 = vadd.f32 %v1137, %v1231
    %v1236 = vadd.f32 %v1158, %v1231
    %v1237 = vadd.f32 %v1179, %v1231
    %v1238 = vadd.f32 %v1200, %v1231
    %v1239 = vadd.f32 %v1221, %v1231
    %v1248 = vcombine.low %v1232, %v1233
    %v1249 = vcombine.low %v1234, %v1235
    %v1250 = vcombine.low %v1236, %v1237
    %v1251 = vcombine.low %v1238, %v1239
    %v1253 = vunpack.c.l.s4 1966171168
    %v1254 = vunpack.c.0.s8 %v1253
    %v1255 = vlaneseq
    %v1256 = vshrl.u32 %v1255, 7
    %v1257 = vsub.s32 %v1254, %v1256
    %v1258 = vrot.slane %v1248, %v1257
    %v1260 = vunpack.c.l.s4 1966171168
    %v1261 = vunpack.c.0.s8 %v1260
    %v1262 = vlaneseq
    %v1263 = vshrl.u32 %v1262, 7
    %v1264 = vsub.s32 %v1261, %v1263
    %v1265 = vrot.slane %v1249, %v1264
    %v1267 = vunpack.c.l.s4 1966171168
    %v1268 = vunpack.c.0.s8 %v1267
    %v1269 = vlaneseq
    %v1270 = vshrl.u32 %v1269, 7
    %v1271 = vsub.s32 %v1268, %v1270
    %v1272 = vrot.slane %v1250, %v1271
    %v1274 = vunpack.c.l.s4 1966171168
    %v1275 = vunpack.c.0.s8 %v1274
    %v1276 = vlaneseq
    %v1277 = vshrl.u32 %v1276, 7
    %v1278 = vsub.s32 %v1275, %v1277
    %v1279 = vrot.slane %v1251, %v1278
    %v1280 = vcombine.low %v1258, %v1265
    %v1281 = vcombine.low %v1272, %v1279
    %v1283 = vunpack.c.l.s4 1966171168
    %v1284 = vunpack.c.0.s8 %v1283
    %v1285 = vlaneseq
    %v1286 = vshrl.u32 %v1285, 7
    %v1287 = vsub.s32 %v1284, %v1286
    %v1288 = vrot.slane %v1280, %v1287
    %v1290 = vunpack.c.l.s4 1966171168
    %v1291 = vunpack.c.0.s8 %v1290
    %v1292 = vlaneseq
    %v1293 = vshrl.u32 %v1292, 7
    %v1294 = vsub.s32 %v1291, %v1293
    %v1295 = vrot.slane %v1281, %v1294
    %v1296 = vcombine.low %v1288, %v1295
    %1298 = vst [vmem:[#allocation3] sm:$0xff] %v1296
    // Predicated region
    $region22: #{tpu_custom_call.1} parent=1 // pred_check
      _
    $region23: #{tpu_custom_call.1} parent=1 // pred_check_branch
      %1300 = sbr.rel (0) target = $region25
    $region24: #{tpu_custom_call.1} parent=1 // pred_region
      %s1302 = ssub.s32 128, 128
      %1303 = vsyncadd [#allocation4], %s1302
      %s1305 = sshll.u32 [#allocation3], 4
      %s1306 = int_to_ptr.vmem [resolvable:$true] %s1305
      %1308 = dma.vmem_to_hbm [thread:$0]  %s1306, 128, %s5, [#allocation4]
    $region25: #{tpu_custom_call.1} parent=1 // pred_fallthru
      _
    // Predicated region
    $region26: #{tpu_custom_call.1} parent=1 // pred_check
      _
    $region27: #{tpu_custom_call.1} parent=1 // pred_check_branch
      %1310 = sbr.rel (0) target = $region29
    $region28: #{tpu_custom_call.1} parent=1 // pred_region
      %1311 = dma.done [#allocation4], 128
    $region29: #{tpu_custom_call.1} parent=1 // pred_fallthru
      _
    %1312 = vsyncpa [#allocation4], 1

</llo_original>
